<compile_context>
chip_gen: v7x
topology: tpu7x:2x2x1
jax: 0.10.0
libtpu: 0.0.40
codegen_flags: <defaults>
</compile_context>

<pallas_src>
import jax
import jax.numpy as jnp
from jax.experimental import pallas as pl
from jax.experimental.pallas import tpu as pltpu

OBSERVATION_SIZE = 4
HIDDEN = 64
OUTPUT_SIZE = 9

MAX_TILE_B = 2048              # batch tile cap: ~4 MiB double-buffered x+out tiles
SMALL_BATCH_XLA_CUTOFF = 256   # below this, fused XLA beats pallas_call fixed cost
VMEM_LIMIT_BYTES = 32 << 20    # explicit scoped-VMEM budget, safe on v5e/v6e/v7x


def _round_up(x, m):
    return ((x + m - 1) // m) * m


def _mlp_kernel(x_ref,
                w1_ref, b1_ref,
                w2_ref, b2_ref,
                w3_ref, b3_ref,
                w4_ref, b4_ref,
                o_ref):
    # bf16 operands -> full-rate MXU; accumulate in f32.
    x = x_ref[...]
    if x.dtype != jnp.bfloat16:
        x = x.astype(jnp.bfloat16)                                    # (TB, 4)

    h = jnp.dot(x, w1_ref[...], preferred_element_type=jnp.float32)
    h = jnp.maximum(h + b1_ref[...], 0.0)                             # (TB, 64)

    h = jnp.dot(h.astype(jnp.bfloat16), w2_ref[...],
                preferred_element_type=jnp.float32)
    h = jnp.maximum(h + b2_ref[...], 0.0)                             # (TB, 64)

    h = jnp.dot(h.astype(jnp.bfloat16), w3_ref[...],
                preferred_element_type=jnp.float32)
    h = jnp.maximum(h + b3_ref[...], 0.0)                             # (TB, 64)

    h = jnp.dot(h.astype(jnp.bfloat16), w4_ref[...],
                preferred_element_type=jnp.float32)
    o_ref[...] = (h + b4_ref[...]).astype(o_ref.dtype)                # (TB, 9)


def _param_index_map(i):
    # Weights / biases: same block for every grid step -> stay VMEM-resident.
    return (0, 0)


def _batch_index_map(i):
    return (i, 0)


def _xla_forward(x, kernel_params):
    """Fused pure-XLA path for small (inference-sized) batches."""
    w1, b1, w2, b2, w3, b3, w4, b4 = kernel_params

    def layer(h, w, b, relu):
        y = jnp.dot(h.astype(jnp.bfloat16), w,
                    preferred_element_type=jnp.float32) + b
        return jnp.maximum(y, 0.0) if relu else y

    h = layer(x, w1, b1, True)
    h = layer(h, w2, b2, True)
    h = layer(h, w3, b3, True)
    return layer(h, w4, b4, False)


def net1_forward(x, kernel_params, tb=None, use_pallas=None):
    """x: (B, OBSERVATION_SIZE) f32 or bf16 -> (B, OUTPUT_SIZE) f32.

    kernel_params: output of prepare_params() (bf16 weights, f32 biases).
    tb: optional batch tile override (rounded to a multiple of 8, clamped).
    use_pallas: force (True) / skip (False) the Pallas path; default picks
                XLA for B <= SMALL_BATCH_XLA_CUTOFF.
    """
    w1, b1, w2, b2, w3, b3, w4, b4 = kernel_params
    B = x.shape[0]

    if use_pallas is None:
        use_pallas = B > SMALL_BATCH_XLA_CUTOFF
    if not use_pallas:
        return _xla_forward(x, kernel_params)

    b8 = _round_up(max(B, 1), 8)
    if tb is None:
        # >=2 grid steps whenever possible (v7x megacore gets both cores busy),
        # large tiles to amortize the ~0.35us per-grid-step pipeline overhead.
        tb = min(MAX_TILE_B, max(_round_up(pl.cdiv(B, 2), 8), 8))
    tb = min(_round_up(tb, 8), b8)      # never tile past round_up(B, 8)

    b_padded = _round_up(b8, tb)
    if b_padded != B:
        x = jnp.pad(x, ((0, b_padded - B), (0, 0)))

    grid = (b_padded // tb,)

    param_spec = lambda arr: pl.BlockSpec(arr.shape, _param_index_map)

    flops_per_row = 2 * (OBSERVATION_SIZE * HIDDEN
                         + HIDDEN * HIDDEN
                         + HIDDEN * HIDDEN
                         + HIDDEN * OUTPUT_SIZE)
    param_bytes = sum(int(p.size) * p.dtype.itemsize for p in kernel_params)
    cost = pl.CostEstimate(
        flops=flops_per_row * b_padded,
        transcendentals=0,
        bytes_accessed=(b_padded * (OBSERVATION_SIZE * x.dtype.itemsize
                                    + OUTPUT_SIZE * 4)
                        + param_bytes),
    )

    out = pl.pallas_call(
        _mlp_kernel,
        out_shape=jax.ShapeDtypeStruct((b_padded, OUTPUT_SIZE), jnp.float32),
        grid=grid,
        in_specs=[
            pl.BlockSpec((tb, OBSERVATION_SIZE), _batch_index_map),
            param_spec(w1), param_spec(b1),
            param_spec(w2), param_spec(b2),
            param_spec(w3), param_spec(b3),
            param_spec(w4), param_spec(b4),
        ],
        out_specs=pl.BlockSpec((tb, OUTPUT_SIZE), _batch_index_map),
        compiler_params=pltpu.CompilerParams(
            dimension_semantics=("parallel",),
            vmem_limit_bytes=VMEM_LIMIT_BYTES),
        cost_estimate=cost,
    )(x, w1, b1, w2, b2, w3, b3, w4, b4)

    if b_padded != B:
        out = out[:B]
    return out


def init_params(key):
    """PyTorch-style init: U(-1/sqrt(fan_in), 1/sqrt(fan_in)), f32.

    Weights stored as (in_features, out_features), biases as (1, out)."""
    def linear(key, fan_in, fan_out):
        kw, kb = jax.random.split(key)
        bound = 1.0 / jnp.sqrt(jnp.float32(fan_in))
        w = jax.random.uniform(kw, (fan_in, fan_out), jnp.float32, -bound, bound)
        b = jax.random.uniform(kb, (1, fan_out), jnp.float32, -bound, bound)
        return w, b

    k1, k2, k3, k4 = jax.random.split(key, 4)
    w1, b1 = linear(k1, OBSERVATION_SIZE, HIDDEN)
    w2, b2 = linear(k2, HIDDEN, HIDDEN)
    w3, b3 = linear(k3, HIDDEN, HIDDEN)
    w4, b4 = linear(k4, HIDDEN, OUTPUT_SIZE)
    return (w1, b1, w2, b2, w3, b3, w4, b4)


def prepare_params(params):
    """One-time conversion to kernel layout: weights -> bf16, biases stay f32."""
    w1, b1, w2, b2, w3, b3, w4, b4 = params
    return (w1.astype(jnp.bfloat16), b1,
            w2.astype(jnp.bfloat16), b2,
            w3.astype(jnp.bfloat16), b3,
            w4.astype(jnp.bfloat16), b4)


def _reference_forward(x, params):
    """Pure-JAX reference mirroring the kernel's bf16-operand / f32-accumulate
    arithmetic (uses the original unpadded f32 params).

    Note: bf16 weights/activations shift logits vs. the f32 PyTorch module at
    the ~1e-2 level; acceptable for DQN argmax action selection here."""
    w1, b1, w2, b2, w3, b3, w4, b4 = params

    def layer(h, w, b, relu):
        y = jnp.dot(h.astype(jnp.bfloat16), w.astype(jnp.bfloat16),
                    preferred_element_type=jnp.float32) + b
        return jnp.maximum(y, 0.0) if relu else y

    h = layer(x, w1, b1, True)
    h = layer(h, w2, b2, True)
    h = layer(h, w3, b3, True)
    return layer(h, w4, b4, False)


# TODO(synk): Net_1.train() (Adam optimizer + MSELoss backward step) has no
# Pallas equivalent here; only the forward pass is implemented.


if __name__ == "__main__":
    key = jax.random.PRNGKey(0)
    k_params, k_x1, k_x2, k_x3 = jax.random.split(key, 4)

    params = init_params(k_params)
    kparams = prepare_params(params)

    # 1) Small inference-style batch, forcing the Pallas kernel path.
    B1 = 8
    x1 = jax.random.normal(k_x1, (B1, OBSERVATION_SIZE), jnp.float32)
    out1 = jax.block_until_ready(net1_forward(x1, kparams, use_pallas=True))
    ref1 = _reference_forward(x1, params)
    assert out1.shape == (B1, OUTPUT_SIZE)
    assert jnp.allclose(out1, ref1, atol=1e-2, rtol=1e-2)

    # 1b) Same small batch via the default dispatch (XLA fast path).
    out1_xla = jax.block_until_ready(net1_forward(x1, kparams))
    assert jnp.allclose(out1_xla, ref1, atol=1e-2, rtol=1e-2)

    # 1c) bf16 input accepted directly (no in-kernel cast).
    out1_bf16 = jax.block_until_ready(
        net1_forward(x1.astype(jnp.bfloat16), kparams, use_pallas=True))
    assert jnp.allclose(out1_bf16, ref1, atol=2e-2, rtol=2e-2)

    # 2) Training/replay-sized batch, default heuristic -> 2 grid steps.
    B2 = 512
    x2 = jax.random.normal(k_x2, (B2, OBSERVATION_SIZE), jnp.float32)
    out2 = jax.block_until_ready(net1_forward(x2, kparams))
    ref2 = _reference_forward(x2, params)
    assert out2.shape == (B2, OUTPUT_SIZE)
    assert jnp.allclose(out2, ref2, atol=1e-2, rtol=1e-2)

    # 3) Non-multiple batch with a small tile override -> 3 grid steps and
    #    wrapper-side row padding/slicing.
    B3 = 300
    x3 = jax.random.normal(k_x3, (B3, OBSERVATION_SIZE), jnp.float32)
    out3 = jax.block_until_ready(net1_forward(x3, kparams, tb=128,
                                              use_pallas=True))
    ref3 = _reference_forward(x3, params)
    assert out3.shape == (B3, OUTPUT_SIZE)
    assert jnp.allclose(out3, ref3, atol=1e-2, rtol=1e-2)

    print("KERNEL_OK")
</pallas_src>

<mosaic_0001>
module attributes {stable_mosaic.version = 11 : i64} {
  func.func @_mlp_kernel(%arg0: i32, %arg1: memref<8x4xf32, #tpu.memory_space<vmem>>, %arg2: memref<4x64xbf16, #tpu.memory_space<vmem>>, %arg3: memref<1x64xf32, #tpu.memory_space<vmem>>, %arg4: memref<64x64xbf16, #tpu.memory_space<vmem>>, %arg5: memref<1x64xf32, #tpu.memory_space<vmem>>, %arg6: memref<64x64xbf16, #tpu.memory_space<vmem>>, %arg7: memref<1x64xf32, #tpu.memory_space<vmem>>, %arg8: memref<64x9xbf16, #tpu.memory_space<vmem>>, %arg9: memref<1x9xf32, #tpu.memory_space<vmem>>, %arg10: memref<8x9xf32, #tpu.memory_space<vmem>>) attributes {dimension_semantics = [#tpu.dimension_semantics<parallel>], iteration_bounds = array<i64: 1>, scalar_prefetch = 0 : i64, scratch_operands = 0 : i64, tpu.core_type = #tpu.core_type<tc>, window_params = [{transform_indices = @transform_0, window_bounds = array<i64: 8, 4>}, {pipeline_mode = #tpu.pipeline_mode<synchronous>, transform_indices = @transform_1, window_bounds = array<i64: 4, 64>}, {pipeline_mode = #tpu.pipeline_mode<synchronous>, transform_indices = @transform_2, window_bounds = array<i64: 1, 64>}, {pipeline_mode = #tpu.pipeline_mode<synchronous>, transform_indices = @transform_3, window_bounds = array<i64: 64, 64>}, {pipeline_mode = #tpu.pipeline_mode<synchronous>, transform_indices = @transform_4, window_bounds = array<i64: 1, 64>}, {pipeline_mode = #tpu.pipeline_mode<synchronous>, transform_indices = @transform_5, window_bounds = array<i64: 64, 64>}, {pipeline_mode = #tpu.pipeline_mode<synchronous>, transform_indices = @transform_6, window_bounds = array<i64: 1, 64>}, {pipeline_mode = #tpu.pipeline_mode<synchronous>, transform_indices = @transform_7, window_bounds = array<i64: 64, 9>}, {pipeline_mode = #tpu.pipeline_mode<synchronous>, transform_indices = @transform_8, window_bounds = array<i64: 1, 9>}, {transform_indices = @transform_9, window_bounds = array<i64: 8, 9>}]} {
    %c0 = arith.constant 0 : index
    %c0_0 = arith.constant 0 : index
    %0 = vector.load %arg1[%c0, %c0_0] : memref<8x4xf32, #tpu.memory_space<vmem>>, vector<8x4xf32>
    %1 = arith.truncf %0 : vector<8x4xf32> to vector<8x4xbf16>
    %c0_1 = arith.constant 0 : index
    %c0_2 = arith.constant 0 : index
    %2 = vector.load %arg2[%c0_1, %c0_2] : memref<4x64xbf16, #tpu.memory_space<vmem>>, vector<4x64xbf16>
    %cst = arith.constant dense<0.000000e+00> : vector<8x64xf32>
    %3 = tpu.matmul %1, %2, %cst {dimension_numbers = #tpu.dot_dimension_numbers<[1], [0], [0], [1], [0, 0, 1, 1], [], []>} : vector<8x4xbf16>, vector<4x64xbf16>, vector<8x64xf32> -> vector<8x64xf32>
    %c0_3 = arith.constant 0 : index
    %c0_4 = arith.constant 0 : index
    %4 = vector.load %arg3[%c0_3, %c0_4] : memref<1x64xf32, #tpu.memory_space<vmem>>, vector<1x64xf32>
    %5 = vector.broadcast %4 : vector<1x64xf32> to vector<8x64xf32>
    %6 = arith.addf %3, %5 : vector<8x64xf32>
    %cst_5 = arith.constant 0.000000e+00 : f32
    %7 = vector.broadcast %cst_5 : f32 to vector<8x64xf32>
    %8 = arith.maximumf %6, %7 : vector<8x64xf32>
    %9 = arith.truncf %8 : vector<8x64xf32> to vector<8x64xbf16>
    %c0_6 = arith.constant 0 : index
    %c0_7 = arith.constant 0 : index
    %10 = vector.load %arg4[%c0_6, %c0_7] : memref<64x64xbf16, #tpu.memory_space<vmem>>, vector<64x64xbf16>
    %cst_8 = arith.constant dense<0.000000e+00> : vector<8x64xf32>
    %11 = tpu.matmul %9, %10, %cst_8 {dimension_numbers = #tpu.dot_dimension_numbers<[1], [0], [0], [1], [0, 0, 1, 1], [], []>} : vector<8x64xbf16>, vector<64x64xbf16>, vector<8x64xf32> -> vector<8x64xf32>
    %c0_9 = arith.constant 0 : index
    %c0_10 = arith.constant 0 : index
    %12 = vector.load %arg5[%c0_9, %c0_10] : memref<1x64xf32, #tpu.memory_space<vmem>>, vector<1x64xf32>
    %13 = vector.broadcast %12 : vector<1x64xf32> to vector<8x64xf32>
    %14 = arith.addf %11, %13 : vector<8x64xf32>
    %cst_11 = arith.constant 0.000000e+00 : f32
    %15 = vector.broadcast %cst_11 : f32 to vector<8x64xf32>
    %16 = arith.maximumf %14, %15 : vector<8x64xf32>
    %17 = arith.truncf %16 : vector<8x64xf32> to vector<8x64xbf16>
    %c0_12 = arith.constant 0 : index
    %c0_13 = arith.constant 0 : index
    %18 = vector.load %arg6[%c0_12, %c0_13] : memref<64x64xbf16, #tpu.memory_space<vmem>>, vector<64x64xbf16>
    %cst_14 = arith.constant dense<0.000000e+00> : vector<8x64xf32>
    %19 = tpu.matmul %17, %18, %cst_14 {dimension_numbers = #tpu.dot_dimension_numbers<[1], [0], [0], [1], [0, 0, 1, 1], [], []>} : vector<8x64xbf16>, vector<64x64xbf16>, vector<8x64xf32> -> vector<8x64xf32>
    %c0_15 = arith.constant 0 : index
    %c0_16 = arith.constant 0 : index
    %20 = vector.load %arg7[%c0_15, %c0_16] : memref<1x64xf32, #tpu.memory_space<vmem>>, vector<1x64xf32>
    %21 = vector.broadcast %20 : vector<1x64xf32> to vector<8x64xf32>
    %22 = arith.addf %19, %21 : vector<8x64xf32>
    %cst_17 = arith.constant 0.000000e+00 : f32
    %23 = vector.broadcast %cst_17 : f32 to vector<8x64xf32>
    %24 = arith.maximumf %22, %23 : vector<8x64xf32>
    %25 = arith.truncf %24 : vector<8x64xf32> to vector<8x64xbf16>
    %c0_18 = arith.constant 0 : index
    %c0_19 = arith.constant 0 : index
    %26 = vector.load %arg8[%c0_18, %c0_19] : memref<64x9xbf16, #tpu.memory_space<vmem>>, vector<64x9xbf16>
    %cst_20 = arith.constant dense<0.000000e+00> : vector<8x9xf32>
    %27 = tpu.matmul %25, %26, %cst_20 {dimension_numbers = #tpu.dot_dimension_numbers<[1], [0], [0], [1], [0, 0, 1, 1], [], []>} : vector<8x64xbf16>, vector<64x9xbf16>, vector<8x9xf32> -> vector<8x9xf32>
    %c0_21 = arith.constant 0 : index
    %c0_22 = arith.constant 0 : index
    %28 = vector.load %arg9[%c0_21, %c0_22] : memref<1x9xf32, #tpu.memory_space<vmem>>, vector<1x9xf32>
    %29 = vector.broadcast %28 : vector<1x9xf32> to vector<8x9xf32>
    %30 = arith.addf %27, %29 : vector<8x9xf32>
    %c0_23 = arith.constant 0 : index
    %c0_24 = arith.constant 0 : index
    %31 = vector.load %arg10[%c0_23, %c0_24] : memref<8x9xf32, #tpu.memory_space<vmem>>, vector<8x9xf32>
    tpu.vector_store %arg10[%c0_23, %c0_24], %30 {strides = array<i32>} : memref<8x9xf32, #tpu.memory_space<vmem>>, vector<8x9xf32>,
    return
  }
  func.func @transform_0(%arg0: i32) -> (i32, i32) {
    %c0_i32 = arith.constant 0 : i32
    %c0_i32_0 = arith.constant 0 : i32
    return %arg0, %c0_i32 : i32, i32
  }
  func.func @transform_1(%arg0: i32) -> (i32, i32) {
    %c0_i32 = arith.constant 0 : i32
    %c0_i32_0 = arith.constant 0 : i32
    %c0_i32_1 = arith.constant 0 : i32
    return %c0_i32, %c0_i32_0 : i32, i32
  }
  func.func @transform_2(%arg0: i32) -> (i32, i32) {
    %c0_i32 = arith.constant 0 : i32
    %c0_i32_0 = arith.constant 0 : i32
    %c0_i32_1 = arith.constant 0 : i32
    return %c0_i32, %c0_i32_0 : i32, i32
  }
  func.func @transform_3(%arg0: i32) -> (i32, i32) {
    %c0_i32 = arith.constant 0 : i32
    %c0_i32_0 = arith.constant 0 : i32
    %c0_i32_1 = arith.constant 0 : i32
    return %c0_i32, %c0_i32_0 : i32, i32
  }
  func.func @transform_4(%arg0: i32) -> (i32, i32) {
    %c0_i32 = arith.constant 0 : i32
    %c0_i32_0 = arith.constant 0 : i32
    %c0_i32_1 = arith.constant 0 : i32
    return %c0_i32, %c0_i32_0 : i32, i32
  }
  func.func @transform_5(%arg0: i32) -> (i32, i32) {
    %c0_i32 = arith.constant 0 : i32
    %c0_i32_0 = arith.constant 0 : i32
    %c0_i32_1 = arith.constant 0 : i32
    return %c0_i32, %c0_i32_0 : i32, i32
  }
  func.func @transform_6(%arg0: i32) -> (i32, i32) {
    %c0_i32 = arith.constant 0 : i32
    %c0_i32_0 = arith.constant 0 : i32
    %c0_i32_1 = arith.constant 0 : i32
    return %c0_i32, %c0_i32_0 : i32, i32
  }
  func.func @transform_7(%arg0: i32) -> (i32, i32) {
    %c0_i32 = arith.constant 0 : i32
    %c0_i32_0 = arith.constant 0 : i32
    %c0_i32_1 = arith.constant 0 : i32
    return %c0_i32, %c0_i32_0 : i32, i32
  }
  func.func @transform_8(%arg0: i32) -> (i32, i32) {
    %c0_i32 = arith.constant 0 : i32
    %c0_i32_0 = arith.constant 0 : i32
    %c0_i32_1 = arith.constant 0 : i32
    return %c0_i32, %c0_i32_0 : i32, i32
  }
  func.func @transform_9(%arg0: i32) -> (i32, i32) {
    %c0_i32 = arith.constant 0 : i32
    %c0_i32_0 = arith.constant 0 : i32
    return %arg0, %c0_i32 : i32, i32
  }
}

</mosaic_0001>

<llo_original>
// kernel: tpu_custom_call.1
$region0: #{tpu_custom_call.1}
  #allocation0 [shape = 'u32[]', space=smem, size = 0x4, offset = 0x4, fixed_abs, tag = 'smem constant byte address 0x4 - core index']
  #allocation1 [shape = 'u32[144,128]{1,0:T(1,128)}', space=vmem, size = 0x12000, scoped, tag = 'internal scratch']
  %s0 = inlined_call_operand.vmem [shape: f32[8,4], index: 0, kind: input, shape index: {}]
  %s1 = inlined_call_operand.vmem [shape: bf16[4,64], index: 1, kind: input, shape index: {}]
  %s2 = inlined_call_operand.hbm [shape: f32[1,64], index: 2, kind: input, shape index: {}]
  %s3 = inlined_call_operand.vmem [shape: bf16[64,64], index: 3, kind: input, shape index: {}]
  %s4 = inlined_call_operand.hbm [shape: f32[1,64], index: 4, kind: input, shape index: {}]
  %s5 = inlined_call_operand.vmem [shape: bf16[64,64], index: 5, kind: input, shape index: {}]
  %s6 = inlined_call_operand.hbm [shape: f32[1,64], index: 6, kind: input, shape index: {}]
  %s7 = inlined_call_operand.vmem [shape: bf16[64,9], index: 7, kind: input, shape index: {}]
  %s8 = inlined_call_operand.vmem [shape: f32[1,9], index: 8, kind: input, shape index: {}]
  %s9 = inlined_call_operand.hbm [shape: f32[8,9], index: 9, kind: output, shape index: {}]
  %s10 = sld [smem:[#allocation0]]
  $region58: #{tpu_custom_call.1} parent=0
    _
  %s12 = ssub.s32 1, %s10
  %s13 = scalar_select 0, %s12, %s10
  $region1: #{tpu_custom_call.1} parent=0
    #allocation2 [shape = 'u8[512]{0}', space=vmem, size = 0x400, scoped, tag = 'input window, operand 2, single buffered']
    #allocation3 [shape = 's32[1]{0}', space=sflag, size = 0x4, scoped, tag = 'scoped memory for tpu_custom_call.1']
    #allocation4 [shape = 's32[1]{0}', space=sflag, size = 0x4, scoped, tag = 'scoped memory for tpu_custom_call.1']
    #allocation5 [shape = 'u8[512]{0}', space=vmem, size = 0x400, scoped, tag = 'input window, operand 4, single buffered']
    #allocation6 [shape = 's32[1]{0}', space=sflag, size = 0x4, scoped, tag = 'scoped memory for tpu_custom_call.1']
    #allocation7 [shape = 'u8[512]{0}', space=vmem, size = 0x400, scoped, tag = 'input window, operand 6, single buffered']
    #allocation8 [shape = 'u8[4096]{0}', space=vmem, size = 0x1000, scoped, tag = 'output window, operand 0, single buffered']
    %14 = vsyncpa [#allocation3], 0
    %15 = vsyncpa [#allocation6], 0
    %16 = vsyncpa [#allocation4], 0
    // Predicated region
    $region2: #{tpu_custom_call.1} parent=1 // pred_check
      _
    $region3: #{tpu_custom_call.1} parent=1 // pred_check_branch
      %18 = sbr.rel (0) target = $region5
    $region4: #{tpu_custom_call.1} parent=1 // pred_region
      _
    $region5: #{tpu_custom_call.1} parent=1 // pred_fallthru
      _
    // Predicated region
    $region6: #{tpu_custom_call.1} parent=1 // pred_check
      _
    $region7: #{tpu_custom_call.1} parent=1 // pred_check_branch
      %20 = sbr.rel (0) target = $region9
    $region8: #{tpu_custom_call.1} parent=1 // pred_region
      _
    $region9: #{tpu_custom_call.1} parent=1 // pred_fallthru
      _
    // Predicated region
    $region10: #{tpu_custom_call.1} parent=1 // pred_check
      _
    $region11: #{tpu_custom_call.1} parent=1 // pred_check_branch
      %22 = sbr.rel (0) target = $region13
    $region12: #{tpu_custom_call.1} parent=1 // pred_region
      %s24 = ssub.s32 16, 16
      %25 = vsyncadd [#allocation3], %s24
      %s27 = sshll.u32 [#allocation2], 4
      %s28 = int_to_ptr.vmem [resolvable:$true] %s27
      %30 = dma.hbm_to_vmem [thread:$0]  %s2, 16, %s28, [#allocation3]
    $region13: #{tpu_custom_call.1} parent=1 // pred_fallthru
      _
    // Predicated region
    $region14: #{tpu_custom_call.1} parent=1 // pred_check
      _
    $region15: #{tpu_custom_call.1} parent=1 // pred_check_branch
      %32 = sbr.rel (0) target = $region17
    $region16: #{tpu_custom_call.1} parent=1 // pred_region
      _
    $region17: #{tpu_custom_call.1} parent=1 // pred_fallthru
      _
    // Predicated region
    $region18: #{tpu_custom_call.1} parent=1 // pred_check
      _
    $region19: #{tpu_custom_call.1} parent=1 // pred_check_branch
      %34 = sbr.rel (0) target = $region21
    $region20: #{tpu_custom_call.1} parent=1 // pred_region
      %s36 = ssub.s32 16, 16
      %37 = vsyncadd [#allocation6], %s36
      %s39 = sshll.u32 [#allocation5], 4
      %s40 = int_to_ptr.vmem [resolvable:$true] %s39
      %42 = dma.hbm_to_vmem [thread:$0]  %s4, 16, %s40, [#allocation6]
    $region21: #{tpu_custom_call.1} parent=1 // pred_fallthru
      _
    // Predicated region
    $region22: #{tpu_custom_call.1} parent=1 // pred_check
      _
    $region23: #{tpu_custom_call.1} parent=1 // pred_check_branch
      %44 = sbr.rel (0) target = $region25
    $region24: #{tpu_custom_call.1} parent=1 // pred_region
      _
    $region25: #{tpu_custom_call.1} parent=1 // pred_fallthru
      _
    // Predicated region
    $region26: #{tpu_custom_call.1} parent=1 // pred_check
      _
    $region27: #{tpu_custom_call.1} parent=1 // pred_check_branch
      %46 = sbr.rel (0) target = $region29
    $region28: #{tpu_custom_call.1} parent=1 // pred_region
      %s48 = ssub.s32 16, 16
      %49 = vsyncadd [#allocation6], %s48
      %s51 = sshll.u32 [#allocation7], 4
      %s52 = int_to_ptr.vmem [resolvable:$true] %s51
      %54 = dma.hbm_to_vmem [thread:$0]  %s6, 16, %s52, [#allocation6]
    $region29: #{tpu_custom_call.1} parent=1 // pred_fallthru
      _
    // Predicated region
    $region30: #{tpu_custom_call.1} parent=1 // pred_check
      _
    $region31: #{tpu_custom_call.1} parent=1 // pred_check_branch
      %56 = sbr.rel (0) target = $region33
    $region32: #{tpu_custom_call.1} parent=1 // pred_region
      _
    $region33: #{tpu_custom_call.1} parent=1 // pred_fallthru
      _
    // Predicated region
    $region34: #{tpu_custom_call.1} parent=1 // pred_check
      _
    $region35: #{tpu_custom_call.1} parent=1 // pred_check_branch
      %58 = sbr.rel (0) target = $region37
    $region36: #{tpu_custom_call.1} parent=1 // pred_region
      _
    $region37: #{tpu_custom_call.1} parent=1 // pred_fallthru
      _
    // Predicated region
    $region38: #{tpu_custom_call.1} parent=1 // pred_check
      _
    $region39: #{tpu_custom_call.1} parent=1 // pred_check_branch
      %60 = sbr.rel (0) target = $region41
    $region40: #{tpu_custom_call.1} parent=1 // pred_region
      %61 = dma.done [#allocation3], 16
    $region41: #{tpu_custom_call.1} parent=1 // pred_fallthru
      _
    // Predicated region
    $region42: #{tpu_custom_call.1} parent=1 // pred_check
      _
    $region43: #{tpu_custom_call.1} parent=1 // pred_check_branch
      %63 = sbr.rel (0) target = $region45
    $region44: #{tpu_custom_call.1} parent=1 // pred_region
      %64 = dma.done [#allocation6], 16
    $region45: #{tpu_custom_call.1} parent=1 // pred_fallthru
      _
    // Predicated region
    $region46: #{tpu_custom_call.1} parent=1 // pred_check
      _
    $region47: #{tpu_custom_call.1} parent=1 // pred_check_branch
      %66 = sbr.rel (0) target = $region49
    $region48: #{tpu_custom_call.1} parent=1 // pred_region
      %67 = dma.done [#allocation6], 16
    $region49: #{tpu_custom_call.1} parent=1 // pred_fallthru
      _
    %v69 = vld [vmem:[%s0] sm:$0xff]
    %v70 = vpack.c.bf16 %v69, %v69
    %v71 = vld [vmem:[%s1] sm:$0x3]
    %v72 = vld [vmem:[#allocation2] sm:$0x1]
    %v74 = vlaneseq
    %v75 = vshrl.u32 %v74, 7
    %v76 = vsub.s32 0, %v75
    %v77 = vrot.slane %v72, %v76
    %vm79 = vcmask 31744
    %v81 = vsel %vm79, %v70, 0
    %vm83 = vcmask 1041408
    %v85 = vsel %vm83, %v71, 0
    %87 = vmatprep.subr.bf16.mxu0 0
    %88 = vmatpush1.bf16.msra.mxu0 %v85
    %89 = vmatprep.subr.bf16.mxu0 0
    %90 = vmatpush1.bf16.msra.mxu0 0
    %91 = vmatprep.subr.bf16.mxu0 0
    %92 = vmatpush1.bf16.msra.mxu0 0
    %93 = vmatprep.subr.bf16.mxu0 0
    %94 = vmatpush1.bf16.msra.mxu0 0
    %95 = vmatprep.subr.bf16.mxu0 0
    %96 = vmatpush1.bf16.msra.mxu0 0
    %97 = vmatprep.subr.bf16.mxu0 0
    %98 = vmatpush1.bf16.msra.mxu0 0
    %99 = vmatprep.subr.bf16.mxu0 0
    %100 = vmatpush1.bf16.msra.mxu0 0
    %101 = vmatprep.subr.bf16.mxu0 0
    %102 = vmatpush1.bf16.msra.mxu0 0
    %103 = vmatprep.subr.bf16.mxu0 0
    %104 = vmatpush1.bf16.msra.mxu0 0
    %105 = vmatprep.subr.bf16.mxu0 0
    %106 = vmatpush1.bf16.msra.mxu0 0
    %107 = vmatprep.subr.bf16.mxu0 0
    %108 = vmatpush1.bf16.msra.mxu0 0
    %109 = vmatprep.subr.bf16.mxu0 0
    %110 = vmatpush1.bf16.msra.mxu0 0
    %111 = vmatprep.subr.bf16.mxu0 0
    %112 = vmatpush1.bf16.msra.mxu0 0
    %113 = vmatprep.subr.bf16.mxu0 0
    %114 = vmatpush1.bf16.msra.mxu0 0
    %115 = vmatprep.subr.bf16.mxu0 0
    %116 = vmatpush1.bf16.msra.mxu0 0
    %117 = vmatprep.subr.bf16.mxu0 0
    %118 = vmatpush1.bf16.msra.mxu0 0
    %119 = vmatprep.mubr.bf16.mxu0 0
    %120 = vmatmul.mubr.bf16.gmra.mrb[0].mxu0 %v81
    %v121 = vpop.f32.mrb[0].mxu0
    %v122 = vadd.f32 %v77, %v121
    %v123 = vpop.f32.mrb[0].mxu0
    %v124 = vpop.f32.mrb[0].mxu0
    %v125 = vpop.f32.mrb[0].mxu0
    %126 = vdwg.mxu0
    %v127 = vmax.f32 %v122, 0.0
    %v128 = vpack.c.bf16 %v127, %v127
    %v129 = vld [vmem:[%s3] sm:$0xf]
    %v130 = vld [vmem:[%s3 + $0x4] sm:$0xf]
    %v131 = vld [vmem:[%s3 + $0x8] sm:$0xf]
    %v132 = vld [vmem:[%s3 + $0xc] sm:$0xf]
    %v133 = vld [vmem:[%s3 + $0x10] sm:$0xf]
    %v134 = vld [vmem:[%s3 + $0x14] sm:$0xf]
    %v135 = vld [vmem:[%s3 + $0x18] sm:$0xf]
    %v136 = vld [vmem:[%s3 + $0x1c] sm:$0xf]
    %v137 = vld [vmem:[#allocation5] sm:$0x1]
    %v139 = vlaneseq
    %v140 = vshrl.u32 %v139, 7
    %v141 = vsub.s32 0, %v140
    %v142 = vrot.slane %v137, %v141
    %v152 = vunpack.c.l.b16 %v129
    %v153 = vunpack.c.l.b16 %v130
    %v154 = vunpack.c.l.b16 %v131
    %v155 = vunpack.c.l.b16 %v132
    %v156 = vunpack.c.l.b16 %v133
    %v157 = vunpack.c.l.b16 %v134
    %v158 = vunpack.c.l.b16 %v135
    %v159 = vunpack.c.l.b16 %v136
    %v160 = vpack.c.b16 %v153, %v152
    %v161 = vpack.c.b16 %v155, %v154
    %v162 = vpack.c.b16 %v157, %v156
    %v163 = vpack.c.b16 %v159, %v158
    %vm168 = vcmask 523264
    %v170 = vsel %vm168, %v128, 0
    %172 = vmatprep.subr.bf16.mxu0 0
    %173 = vmatpush1.bf16.msra.mxu0 %v160
    %174 = vmatprep.subr.bf16.mxu0 0
    %175 = vmatpush1.bf16.msra.mxu0 %v161
    %176 = vmatprep.subr.bf16.mxu0 0
    %177 = vmatpush1.bf16.msra.mxu0 %v162
    %178 = vmatprep.subr.bf16.mxu0 0
    %179 = vmatpush1.bf16.msra.mxu0 %v163
    %180 = vmatprep.subr.bf16.mxu0 0
    %181 = vmatpush1.bf16.msra.mxu0 0
    %182 = vmatprep.subr.bf16.mxu0 0
    %183 = vmatpush1.bf16.msra.mxu0 0
    %184 = vmatprep.subr.bf16.mxu0 0
    %185 = vmatpush1.bf16.msra.mxu0 0
    %186 = vmatprep.subr.bf16.mxu0 0
    %187 = vmatpush1.bf16.msra.mxu0 0
    %188 = vmatprep.subr.bf16.mxu0 0
    %189 = vmatpush1.bf16.msra.mxu0 0
    %190 = vmatprep.subr.bf16.mxu0 0
    %191 = vmatpush1.bf16.msra.mxu0 0
    %192 = vmatprep.subr.bf16.mxu0 0
    %193 = vmatpush1.bf16.msra.mxu0 0
    %194 = vmatprep.subr.bf16.mxu0 0
    %195 = vmatpush1.bf16.msra.mxu0 0
    %196 = vmatprep.subr.bf16.mxu0 0
    %197 = vmatpush1.bf16.msra.mxu0 0
    %198 = vmatprep.subr.bf16.mxu0 0
    %199 = vmatpush1.bf16.msra.mxu0 0
    %200 = vmatprep.subr.bf16.mxu0 0
    %201 = vmatpush1.bf16.msra.mxu0 0
    %202 = vmatprep.subr.bf16.mxu0 0
    %203 = vmatpush1.bf16.msra.mxu0 0
    %204 = vmatprep.mubr.bf16.mxu0 0
    %205 = vmatmul.mubr.bf16.gmra.mrb[0].mxu0 %v170
    %v206 = vpop.f32.mrb[0].mxu0
    %v207 = vadd.f32 %v142, %v206
    %v208 = vpop.f32.mrb[0].mxu0
    %v209 = vpop.f32.mrb[0].mxu0
    %v210 = vpop.f32.mrb[0].mxu0
    %211 = vdwg.mxu0
    %v212 = vmax.f32 %v207, 0.0
    %v213 = vpack.c.bf16 %v212, %v212
    %v214 = vld [vmem:[%s5] sm:$0xf]
    %v215 = vld [vmem:[%s5 + $0x4] sm:$0xf]
    %v216 = vld [vmem:[%s5 + $0x8] sm:$0xf]
    %v217 = vld [vmem:[%s5 + $0xc] sm:$0xf]
    %v218 = vld [vmem:[%s5 + $0x10] sm:$0xf]
    %v219 = vld [vmem:[%s5 + $0x14] sm:$0xf]
    %v220 = vld [vmem:[%s5 + $0x18] sm:$0xf]
    %v221 = vld [vmem:[%s5 + $0x1c] sm:$0xf]
    %v222 = vld [vmem:[#allocation7] sm:$0x1]
    %v224 = vlaneseq
    %v225 = vshrl.u32 %v224, 7
    %v226 = vsub.s32 0, %v225
    %v227 = vrot.slane %v222, %v226
    %v237 = vunpack.c.l.b16 %v214
    %v238 = vunpack.c.l.b16 %v215
    %v239 = vunpack.c.l.b16 %v216
    %v240 = vunpack.c.l.b16 %v217
    %v241 = vunpack.c.l.b16 %v218
    %v242 = vunpack.c.l.b16 %v219
    %v243 = vunpack.c.l.b16 %v220
    %v244 = vunpack.c.l.b16 %v221
    %v245 = vpack.c.b16 %v238, %v237
    %v246 = vpack.c.b16 %v240, %v239
    %v247 = vpack.c.b16 %v242, %v241
    %v248 = vpack.c.b16 %v244, %v243
    %v254 = vsel %vm168, %v213, 0
    %256 = vmatprep.subr.bf16.mxu0 0
    %257 = vmatpush1.bf16.msra.mxu0 %v245
    %258 = vmatprep.subr.bf16.mxu0 0
    %259 = vmatpush1.bf16.msra.mxu0 %v246
    %260 = vmatprep.subr.bf16.mxu0 0
    %261 = vmatpush1.bf16.msra.mxu0 %v247
    %262 = vmatprep.subr.bf16.mxu0 0
    %263 = vmatpush1.bf16.msra.mxu0 %v248
    %264 = vmatprep.subr.bf16.mxu0 0
    %265 = vmatpush1.bf16.msra.mxu0 0
    %266 = vmatprep.subr.bf16.mxu0 0
    %267 = vmatpush1.bf16.msra.mxu0 0
    %268 = vmatprep.subr.bf16.mxu0 0
    %269 = vmatpush1.bf16.msra.mxu0 0
    %270 = vmatprep.subr.bf16.mxu0 0
    %271 = vmatpush1.bf16.msra.mxu0 0
    %272 = vmatprep.subr.bf16.mxu0 0
    %273 = vmatpush1.bf16.msra.mxu0 0
    %274 = vmatprep.subr.bf16.mxu0 0
    %275 = vmatpush1.bf16.msra.mxu0 0
    %276 = vmatprep.subr.bf16.mxu0 0
    %277 = vmatpush1.bf16.msra.mxu0 0
    %278 = vmatprep.subr.bf16.mxu0 0
    %279 = vmatpush1.bf16.msra.mxu0 0
    %280 = vmatprep.subr.bf16.mxu0 0
    %281 = vmatpush1.bf16.msra.mxu0 0
    %282 = vmatprep.subr.bf16.mxu0 0
    %283 = vmatpush1.bf16.msra.mxu0 0
    %284 = vmatprep.subr.bf16.mxu0 0
    %285 = vmatpush1.bf16.msra.mxu0 0
    %286 = vmatprep.subr.bf16.mxu0 0
    %287 = vmatpush1.bf16.msra.mxu0 0
    %288 = vmatprep.mubr.bf16.mxu0 0
    %289 = vmatmul.mubr.bf16.gmra.mrb[0].mxu0 %v254
    %v290 = vpop.f32.mrb[0].mxu0
    %v291 = vadd.f32 %v227, %v290
    %v292 = vpop.f32.mrb[0].mxu0
    %v293 = vpop.f32.mrb[0].mxu0
    %v294 = vpop.f32.mrb[0].mxu0
    %295 = vdwg.mxu0
    %v296 = vmax.f32 %v291, 0.0
    %v297 = vpack.c.bf16 %v296, %v296
    %v298 = vld [vmem:[%s7] sm:$0xf]
    %v299 = vld [vmem:[%s7 + $0x4] sm:$0xf]
    %v300 = vld [vmem:[%s7 + $0x8] sm:$0xf]
    %v301 = vld [vmem:[%s7 + $0xc] sm:$0xf]
    %v302 = vld [vmem:[%s7 + $0x10] sm:$0xf]
    %v303 = vld [vmem:[%s7 + $0x14] sm:$0xf]
    %v304 = vld [vmem:[%s7 + $0x18] sm:$0xf]
    %v305 = vld [vmem:[%s7 + $0x1c] sm:$0xf]
    %v306 = vld [vmem:[%s8] sm:$0x1]
    %v308 = vlaneseq
    %v309 = vshrl.u32 %v308, 7
    %v310 = vsub.s32 0, %v309
    %v311 = vrot.slane %v306, %v310
    %v321 = vunpack.c.l.b16 %v298
    %v322 = vunpack.c.l.b16 %v299
    %v323 = vunpack.c.l.b16 %v300
    %v324 = vunpack.c.l.b16 %v301
    %v325 = vunpack.c.l.b16 %v302
    %v326 = vunpack.c.l.b16 %v303
    %v327 = vunpack.c.l.b16 %v304
    %v328 = vunpack.c.l.b16 %v305
    %v329 = vpack.c.b16 %v322, %v321
    %v330 = vpack.c.b16 %v324, %v323
    %v331 = vpack.c.b16 %v326, %v325
    %v332 = vpack.c.b16 %v328, %v327
    %v338 = vsel %vm168, %v297, 0
    %340 = vmatprep.subr.bf16.mxu0 0
    %341 = vmatpush1.bf16.msra.mxu0 %v329
    %342 = vmatprep.subr.bf16.mxu0 0
    %343 = vmatpush1.bf16.msra.mxu0 %v330
    %344 = vmatprep.subr.bf16.mxu0 0
    %345 = vmatpush1.bf16.msra.mxu0 %v331
    %346 = vmatprep.subr.bf16.mxu0 0
    %347 = vmatpush1.bf16.msra.mxu0 %v332
    %348 = vmatprep.subr.bf16.mxu0 0
    %349 = vmatpush1.bf16.msra.mxu0 0
    %350 = vmatprep.subr.bf16.mxu0 0
    %351 = vmatpush1.bf16.msra.mxu0 0
    %352 = vmatprep.subr.bf16.mxu0 0
    %353 = vmatpush1.bf16.msra.mxu0 0
    %354 = vmatprep.subr.bf16.mxu0 0
    %355 = vmatpush1.bf16.msra.mxu0 0
    %356 = vmatprep.subr.bf16.mxu0 0
    %357 = vmatpush1.bf16.msra.mxu0 0
    %358 = vmatprep.subr.bf16.mxu0 0
    %359 = vmatpush1.bf16.msra.mxu0 0
    %360 = vmatprep.subr.bf16.mxu0 0
    %361 = vmatpush1.bf16.msra.mxu0 0
    %362 = vmatprep.subr.bf16.mxu0 0
    %363 = vmatpush1.bf16.msra.mxu0 0
    %364 = vmatprep.subr.bf16.mxu0 0
    %365 = vmatpush1.bf16.msra.mxu0 0
    %366 = vmatprep.subr.bf16.mxu0 0
    %367 = vmatpush1.bf16.msra.mxu0 0
    %368 = vmatprep.subr.bf16.mxu0 0
    %369 = vmatpush1.bf16.msra.mxu0 0
    %370 = vmatprep.subr.bf16.mxu0 0
    %371 = vmatpush1.bf16.msra.mxu0 0
    %372 = vmatprep.mubr.bf16.mxu0 0
    %373 = vmatmul.mubr.bf16.gmra.mrb[0].mxu0 %v338
    %v374 = vpop.f32.mrb[0].mxu0
    %v375 = vadd.f32 %v311, %v374
    %v376 = vpop.f32.mrb[0].mxu0
    %v377 = vpop.f32.mrb[0].mxu0
    %v378 = vpop.f32.mrb[0].mxu0
    %379 = vdwg.mxu0
    %vm380 = vcmask 72704
    %381 = vst.msk [vmem:[#allocation8] sm:$0xff] %vm380, %v375
    // Predicated region
    $region50: #{tpu_custom_call.1} parent=1 // pred_check
      _
    $region51: #{tpu_custom_call.1} parent=1 // pred_check_branch
      %383 = sbr.rel (0) target = $region53
    $region52: #{tpu_custom_call.1} parent=1 // pred_region
      %s385 = ssub.s32 128, 128
      %386 = vsyncadd [#allocation4], %s385
      %s388 = sshll.u32 [#allocation8], 4
      %s389 = int_to_ptr.vmem [resolvable:$true] %s388
      %391 = dma.vmem_to_hbm [thread:$0]  %s389, 128, %s9, [#allocation4]
    $region53: #{tpu_custom_call.1} parent=1 // pred_fallthru
      _
    // Predicated region
    $region54: #{tpu_custom_call.1} parent=1 // pred_check
      _
    $region55: #{tpu_custom_call.1} parent=1 // pred_check_branch
      %393 = sbr.rel (0) target = $region57
    $region56: #{tpu_custom_call.1} parent=1 // pred_region
      %394 = dma.done [#allocation4], 128
    $region57: #{tpu_custom_call.1} parent=1 // pred_fallthru
      _
    %395 = vsyncpa [#allocation3], 1
    %396 = vsyncpa [#allocation6], 1
    %397 = vsyncpa [#allocation4], 1

</llo_original>
